<compile_context>
chip_gen: v7x
topology: tpu7x:2x2x1
jax: 0.10.0
libtpu: 0.0.40
codegen_flags: <defaults>
</compile_context>

<pallas_src>
import functools
import math

import jax
import jax.numpy as jnp
from jax.experimental import pallas as pl
from jax.experimental.pallas import tpu as pltpu

BN_EPS = 1e-5
BN_FOLD_SCALE = 1.0 / math.sqrt(1.0 + BN_EPS)   # eval-mode BN folded into conv weights

_MAX_TM = 512                      # M-tile cap (multiple of 8)
_MAX_TN = 512                      # N-tile cap (multiple of 128)
_VMEM_LIMIT = 48 * 1024 * 1024     # safe on v5e/v6e (128 MiB) and v7x (64 MiB/TC)


def _round_up(n, m):
    return ((n + m - 1) // m) * m


def _pick_tile(dim, max_tile, align):
    """Largest tile <= max_tile that is a multiple of `align` and divides `dim`
    exactly (so no padding copies are ever needed).  If dim <= max_tile the whole
    dim is one block (full-extent blocks are always legal for BlockSpec)."""
    if dim <= max_tile:
        return dim
    t = (max_tile // align) * align
    while t >= align:
        if dim % t == 0:
            return t
        t -= align
    return dim


# ----------------------------------------------------------------------------
# Pallas kernel: single-shot (K not grid-tiled) GEMM with fused bias + act
# (+ optional fused residual add for the bottleneck conv3).
# ----------------------------------------------------------------------------
def _gemm_kernel(x_ref, w_ref, b_ref, *rest, act, has_residual):
    if has_residual:
        r_ref, o_ref = rest
    else:
        (o_ref,) = rest
    # bf16 x bf16 -> f32 accumulate on the MXU; epilogue stays in f32.
    y = jnp.dot(x_ref[...], w_ref[...], preferred_element_type=jnp.float32)
    y = y + b_ref[...]
    if has_residual:
        y = y + r_ref[...].astype(jnp.float32)
    if act == "relu":
        y = jnp.maximum(y, 0.0)
    elif act == "elu":
        # ELU(alpha=1): y if y > 0 else exp(y) - 1
        y = jnp.where(y > 0.0, y, jnp.expm1(jnp.minimum(y, 0.0)))
    o_ref[...] = y.astype(o_ref.dtype)


@functools.lru_cache(maxsize=None)
def _build_gemm(M, K, N, act, has_residual, out_dtype_name):
    out_dtype = jnp.dtype(out_dtype_name)
    Kp = _round_up(K, 16)                       # bf16 sublane packing; only stem (147) pads
    TM = _pick_tile(M, _MAX_TM, 8)
    TN = _pick_tile(N, _MAX_TN, 128)
    grid = (M // TM, N // TN)

    in_specs = [
        pl.BlockSpec((TM, Kp), lambda i, j: (i, 0)),      # full K per block: 1-shot reduce
        pl.BlockSpec((Kp, TN), lambda i, j: (0, j)),
        pl.BlockSpec((1, TN), lambda i, j: (0, j)),
    ]
    if has_residual:
        in_specs.append(pl.BlockSpec((TM, TN), lambda i, j: (i, j)))

    flops = 2 * M * N * Kp
    bytes_accessed = 2 * M * Kp + 2 * Kp * N + 4 * N + M * N * out_dtype.itemsize
    if has_residual:
        bytes_accessed += 2 * M * N

    call = pl.pallas_call(
        functools.partial(_gemm_kernel, act=act, has_residual=has_residual),
        out_shape=jax.ShapeDtypeStruct((M, N), out_dtype),
        grid_spec=pltpu.PrefetchScalarGridSpec(
            num_scalar_prefetch=0,
            grid=grid,
            in_specs=in_specs,
            out_specs=pl.BlockSpec((TM, TN), lambda i, j: (i, j)),
        ),
        compiler_params=pltpu.CompilerParams(
            dimension_semantics=("parallel", "parallel"),
            vmem_limit_bytes=_VMEM_LIMIT),
        cost_estimate=pl.CostEstimate(
            flops=flops,
            transcendentals=M * N if act == "elu" else 0,
            bytes_accessed=bytes_accessed),
    )

    def fn(x, w, b, *res):
        x = x.astype(jnp.bfloat16)
        w = w.astype(jnp.bfloat16)
        b = b.reshape(1, N).astype(jnp.float32)
        if Kp != K:                              # only the 7x7 stem (K=147) hits this
            x = jnp.pad(x, ((0, 0), (0, Kp - K)))
            w = jnp.pad(w, ((0, Kp - K), (0, 0)))
        res = tuple(r.astype(jnp.bfloat16) for r in res)
        return call(x, w, b, *res)

    return jax.jit(fn)


def matmul_bias_act(x, w, b, act="none", residual=None, out_dtype=jnp.bfloat16):
    """act(x @ w + b [+ residual]) via the Pallas TPU GEMM kernel."""
    M, K = x.shape
    N = w.shape[1]
    fn = _build_gemm(M, K, N, act, residual is not None, jnp.dtype(out_dtype).name)
    args = (x, w, b) if residual is None else (x, w, b, residual)
    return fn(*args)


# ----------------------------------------------------------------------------
# Pallas kernel: fused stride-1 3x3 conv (+ReLU) without materialized im2col.
# The padded NHWC map is flattened to (rows, Cin); tap (i, j) is the same array
# shifted by i*Wp + j rows, so the kernel accumulates 9 MXU matmuls over static
# row-offset slices held entirely in VMEM (batch-2 maps are tiny).
# ----------------------------------------------------------------------------
def _conv3x3_kernel(x_ref, w_ref, b_ref, o_ref, *, offsets, m_rows):
    acc = None
    for t, off in enumerate(offsets):
        xs = x_ref[pl.ds(off, m_rows), :]                 # static shifted view in VMEM
        part = jnp.dot(xs, w_ref[t], preferred_element_type=jnp.float32)
        acc = part if acc is None else acc + part
    y = jnp.maximum(acc + b_ref[...], 0.0)                # fused bias (zero) + ReLU
    o_ref[...] = y.astype(o_ref.dtype)


@functools.lru_cache(maxsize=None)
def _build_conv3x3_s1(N, H, W, Cin, Cout):
    Hp, Wp = H + 2, W + 2
    m_rows = N * Hp * Wp                                  # conv at every padded anchor
    P = _round_up(m_rows + 2 * Wp + 2, 8)                 # tail keeps all shifted reads in bounds
    offsets = tuple(i * Wp + j for i in range(3) for j in range(3))
    TN = _pick_tile(Cout, 256, 128)
    grid = (Cout // TN,)

    call = pl.pallas_call(
        functools.partial(_conv3x3_kernel, offsets=offsets, m_rows=m_rows),
        out_shape=jax.ShapeDtypeStruct((m_rows, Cout), jnp.bfloat16),
        grid_spec=pltpu.PrefetchScalarGridSpec(
            num_scalar_prefetch=0,
            grid=grid,
            in_specs=[
                pl.BlockSpec((P, Cin), lambda j: (0, 0)),          # whole flat map in VMEM
                pl.BlockSpec((9, Cin, TN), lambda j: (0, 0, j)),   # per-tap weights
                pl.BlockSpec((1, TN), lambda j: (0, j)),
            ],
            out_specs=pl.BlockSpec((m_rows, TN), lambda j: (0, j)),
        ),
        compiler_params=pltpu.CompilerParams(
            dimension_semantics=("parallel",),
            vmem_limit_bytes=_VMEM_LIMIT),
        cost_estimate=pl.CostEstimate(
            flops=2 * m_rows * Cout * Cin * 9,
            transcendentals=0,
            bytes_accessed=2 * P * Cin + 2 * 9 * Cin * Cout + 4 * Cout + 2 * m_rows * Cout),
    )

    def fn(x_nhwc, w_hwio):
        xb = x_nhwc.astype(jnp.bfloat16)
        xp = jnp.pad(xb, ((0, 0), (1, 1), (1, 1), (0, 0)))
        xf = xp.reshape(N * Hp * Wp, Cin)
        xf = jnp.pad(xf, ((0, P - N * Hp * Wp), (0, 0)))
        wt = w_hwio.reshape(9, Cin, Cout).astype(jnp.bfloat16)
        b = jnp.zeros((1, Cout), jnp.float32)
        yf = call(xf, wt, b)                                       # (N*Hp*Wp, Cout)
        return yf.reshape(N, Hp, Wp, Cout)[:, :H, :W, :]           # drop border anchors

    return jax.jit(fn)


# ----------------------------------------------------------------------------
# Conv / pool glue (weights stored HWIO so no runtime weight transposes).
# ----------------------------------------------------------------------------
def conv2d(x_nhwc, w_hwio, stride=1, pad=0, act="none", residual=None):
    kh, kw, Cin, Cout = w_hwio.shape
    N, H, W, C = x_nhwc.shape
    assert C == Cin
    x_nhwc = x_nhwc.astype(jnp.bfloat16)
    bias = jnp.zeros((Cout,), jnp.float32)        # conv bias is zero (BN beta folded = 0)

    if kh == 3 and kw == 3 and stride == 1 and pad == 1 and act == "relu" and residual is None:
        return _build_conv3x3_s1(N, H, W, Cin, Cout)(x_nhwc, w_hwio)

    if kh == 1 and kw == 1 and pad == 0:
        xs = x_nhwc if stride == 1 else x_nhwc[:, ::stride, ::stride, :]
        Ho, Wo = xs.shape[1], xs.shape[2]
        cols = xs.reshape(N * Ho * Wo, Cin)
    else:
        # TODO(synk): im2col kept in XLA only for the few strided convs (7x7 stem and
        # one 3x3 stride-2 conv per stage); all stride-1 3x3 convs use the fused kernel.
        xp = jnp.pad(x_nhwc, ((0, 0), (pad, pad), (pad, pad), (0, 0)))
        Ho = (H + 2 * pad - kh) // stride + 1
        Wo = (W + 2 * pad - kw) // stride + 1
        patches = [xp[:, i:i + stride * Ho:stride, j:j + stride * Wo:stride, :]
                   for i in range(kh) for j in range(kw)]
        p = jnp.stack(patches, axis=3)                    # (N, Ho, Wo, kh*kw, Cin)
        cols = p.reshape(N * Ho * Wo, kh * kw * Cin)      # tap-major, matches HWIO weight

    wmat = w_hwio.reshape(kh * kw * Cin, Cout)
    res2d = None if residual is None else residual.reshape(N * Ho * Wo, Cout)
    y = matmul_bias_act(cols, wmat, bias, act=act, residual=res2d)
    return y.reshape(N, Ho, Wo, Cout)


def maxpool_3x3_s2_p1(x_nhwc):
    # TODO(synk): max-pool / avg-pool stay as cheap XLA elementwise ops (not the bottleneck).
    N, H, W, C = x_nhwc.shape
    xp = jnp.pad(x_nhwc, ((0, 0), (1, 1), (1, 1), (0, 0)), constant_values=-jnp.inf)
    Ho = (H + 2 - 3) // 2 + 1
    Wo = (W + 2 - 3) // 2 + 1
    out = jnp.full((N, Ho, Wo, C), -jnp.inf, x_nhwc.dtype)
    for i in range(3):
        for j in range(3):
            out = jnp.maximum(out, xp[:, i:i + 2 * Ho:2, j:j + 2 * Wo:2, :])
    return out


# ----------------------------------------------------------------------------
# Deterministic synthetic parameters (ResNet-50 + head); BN folded into convs.
# Conv weights stored HWIO (kh, kw, Cin, Cout) in bf16; FC weights (in, out) bf16.
# ----------------------------------------------------------------------------
class _KeyGen:
    def __init__(self, key):
        self.key = key
        self.i = 0

    def __call__(self):
        self.i += 1
        return jax.random.fold_in(self.key, self.i)


def _conv_w(key, cout, cin, k):
    std = math.sqrt(2.0 / (cout * k * k))                  # kaiming_normal_(fan_out)
    w = jax.random.normal(key, (k, k, cin, cout), jnp.float32) * std
    return (w * BN_FOLD_SCALE).astype(jnp.bfloat16)        # fold eval-mode BatchNorm


def _linear(key, fan_in, fan_out):
    kw_, kb = jax.random.split(key)
    bound = 1.0 / math.sqrt(fan_in)
    w = jax.random.uniform(kw_, (fan_in, fan_out), jnp.float32, -bound, bound)
    b = jax.random.uniform(kb, (fan_out,), jnp.float32, -bound, bound)
    return w.astype(jnp.bfloat16), b


def make_params(key):
    kg = _KeyGen(key)
    params = {"conv1": _conv_w(kg(), 64, 3, 7), "layers": [], "fc": [], "out": None}
    inplanes = 64
    for planes, nblocks in zip([64, 128, 256, 512], [3, 4, 6, 3]):    # ResNet-50
        stage = []
        for bi in range(nblocks):
            blk = {
                "conv1": _conv_w(kg(), planes, inplanes, 1),
                "conv2": _conv_w(kg(), planes, planes, 3),
                "conv3": _conv_w(kg(), planes * 4, planes, 1),
                "downsample": _conv_w(kg(), planes * 4, inplanes, 1) if bi == 0 else None,
            }
            stage.append(blk)
            inplanes = planes * 4
        params["layers"].append(stage)
    dims = [2048, 512, 256, 64]
    for i in range(3):
        params["fc"].append(_linear(kg(), dims[i], dims[i + 1]))
    params["out"] = _linear(kg(), 64, 1)
    return params


# ----------------------------------------------------------------------------
# Forward pass (mirrors TruckResnet50.forward)
# ----------------------------------------------------------------------------
def _bottleneck(x, blk, stride):
    if blk["downsample"] is not None:
        identity = conv2d(x, blk["downsample"], stride=stride, pad=0, act="none")
    else:
        identity = x
    out = conv2d(x, blk["conv1"], stride=1, pad=0, act="relu")
    out = conv2d(out, blk["conv2"], stride=stride, pad=1, act="relu")
    # conv3 (1x1): residual add + final ReLU fused into the GEMM epilogue.
    out = conv2d(out, blk["conv3"], stride=1, pad=0, act="relu", residual=identity)
    return out


def truck_resnet50_forward(x, params):
    B = x.shape[0]
    x = x.reshape(B, 3, 224, 224)                 # x.view(x.size(0), 3, 224, 224)
    x = jnp.transpose(x, (0, 2, 3, 1))            # NCHW -> NHWC (internal layout)

    # ResNet-50 stem: conv1 + bn1 + relu, 3x3/2 maxpool
    x = conv2d(x, params["conv1"], stride=2, pad=3, act="relu")
    x = maxpool_3x3_s2_p1(x)

    # 4 stages of Bottleneck blocks (3, 4, 6, 3)
    for stage, stride in zip(params["layers"], [1, 2, 2, 2]):
        for bi, blk in enumerate(stage):
            x = _bottleneck(x, blk, stride if bi == 0 else 1)

    # adaptive average pool to 1x1 -> (B, 2048); resnet.fc == Identity
    x = jnp.mean(x.astype(jnp.float32), axis=(1, 2))

    # head: Linear(2048,512)+ELU, Linear(512,256)+ELU, Linear(256,64)+ELU
    for w, b in params["fc"]:
        x = matmul_bias_act(x, w, b, act="elu")
    # out: Linear(64, 1)
    w, b = params["out"]
    x = matmul_bias_act(x, w, b, act="none", out_dtype=jnp.float32)
    return x                                       # (B, 1)


if __name__ == "__main__":
    key = jax.random.PRNGKey(0)
    kp, kx = jax.random.split(key)
    params = make_params(kp)
    x = jax.random.normal(kx, (2, 3, 224, 224), jnp.float32)

    y = truck_resnet50_forward(x, params)
    y = jax.block_until_ready(y)
    assert y.shape == (2, 1) and y.dtype == jnp.float32
    assert bool(jnp.all(jnp.isfinite(y)))
    print("KERNEL_OK")
</pallas_src>

<mosaic_0001>
module attributes {stable_mosaic.version = 11 : i64} {
  func.func @_gemm_kernel(%arg0: i32, %arg1: i32, %arg2: memref<512x160xbf16, #tpu.memory_space<vmem>>, %arg3: memref<160x64xbf16, #tpu.memory_space<vmem>>, %arg4: memref<1x64xf32, #tpu.memory_space<vmem>>, %arg5: memref<512x64xbf16, #tpu.memory_space<vmem>>) attributes {dimension_semantics = [#tpu.dimension_semantics<parallel>, #tpu.dimension_semantics<parallel>], iteration_bounds = array<i64: 49, 1>, scalar_prefetch = 0 : i64, scratch_operands = 0 : i64, tpu.core_type = #tpu.core_type<tc>, window_params = [{transform_indices = @transform_0, window_bounds = array<i64: 512, 160>}, {transform_indices = @transform_1, window_bounds = array<i64: 160, 64>}, {transform_indices = @transform_2, window_bounds = array<i64: 1, 64>}, {transform_indices = @transform_3, window_bounds = array<i64: 512, 64>}]} {
    %c0 = arith.constant 0 : index
    %c0_0 = arith.constant 0 : index
    %0 = vector.load %arg2[%c0, %c0_0] : memref<512x160xbf16, #tpu.memory_space<vmem>>, vector<512x160xbf16>
    %c0_1 = arith.constant 0 : index
    %c0_2 = arith.constant 0 : index
    %1 = vector.load %arg3[%c0_1, %c0_2] : memref<160x64xbf16, #tpu.memory_space<vmem>>, vector<160x64xbf16>
    %cst = arith.constant dense<0.000000e+00> : vector<512x64xf32>
    %2 = tpu.matmul %0, %1, %cst {dimension_numbers = #tpu.dot_dimension_numbers<[1], [0], [0], [1], [0, 0, 1, 1], [], []>} : vector<512x160xbf16>, vector<160x64xbf16>, vector<512x64xf32> -> vector<512x64xf32>
    %c0_3 = arith.constant 0 : index
    %c0_4 = arith.constant 0 : index
    %3 = vector.load %arg4[%c0_3, %c0_4] : memref<1x64xf32, #tpu.memory_space<vmem>>, vector<1x64xf32>
    %4 = vector.broadcast %3 : vector<1x64xf32> to vector<512x64xf32>
    %5 = arith.addf %2, %4 : vector<512x64xf32>
    %cst_5 = arith.constant 0.000000e+00 : f32
    %6 = vector.broadcast %cst_5 : f32 to vector<512x64xf32>
    %7 = arith.maximumf %5, %6 : vector<512x64xf32>
    %8 = arith.truncf %7 : vector<512x64xf32> to vector<512x64xbf16>
    %c0_6 = arith.constant 0 : index
    %c0_7 = arith.constant 0 : index
    %9 = vector.load %arg5[%c0_6, %c0_7] : memref<512x64xbf16, #tpu.memory_space<vmem>>, vector<512x64xbf16>
    tpu.vector_store %arg5[%c0_6, %c0_7], %8 {strides = array<i32>} : memref<512x64xbf16, #tpu.memory_space<vmem>>, vector<512x64xbf16>,
    return
  }
  func.func @transform_0(%arg0: i32, %arg1: i32) -> (i32, i32) {
    %c0_i32 = arith.constant 0 : i32
    %c0_i32_0 = arith.constant 0 : i32
    return %arg0, %c0_i32 : i32, i32
  }
  func.func @transform_1(%arg0: i32, %arg1: i32) -> (i32, i32) {
    %c0_i32 = arith.constant 0 : i32
    %c0_i32_0 = arith.constant 0 : i32
    return %c0_i32, %arg1 : i32, i32
  }
  func.func @transform_2(%arg0: i32, %arg1: i32) -> (i32, i32) {
    %c0_i32 = arith.constant 0 : i32
    %c0_i32_0 = arith.constant 0 : i32
    return %c0_i32, %arg1 : i32, i32
  }
  func.func @transform_3(%arg0: i32, %arg1: i32) -> (i32, i32) {
    %c0_i32 = arith.constant 0 : i32
    return %arg0, %arg1 : i32, i32
  }
}

</mosaic_0001>

<llo_original>
// kernel: fn.1
$region0: #{fn.1}
  #allocation0 [shape = 'u32[]', space=smem, size = 0x4, offset = 0x4, fixed_abs, tag = 'smem constant byte address 0x4 - core index']
  #allocation1 [shape = 'u32[144,128]{1,0:T(1,128)}', space=vmem, size = 0x12000, scoped, tag = 'internal scratch']
  %s0 = inlined_call_operand.vmem [shape: bf16[25088,160], index: 0, kind: input, shape index: {}]
  %s1 = inlined_call_operand.vmem [shape: bf16[160,64], index: 1, kind: input, shape index: {}]
  %s2 = inlined_call_operand.vmem [shape: f32[1,64], index: 2, kind: input, shape index: {}]
  %s3 = inlined_call_operand.hbm [shape: bf16[25088,64], index: 3, kind: output, shape index: {}]
  %s4 = sld [smem:[#allocation0]]
  $region45: #{fn.1} parent=0
    _
  %s6 = ssub.s32 1, %s4
  %s7 = scalar_select 0, %s6, %s4
  $region1: #{fn.1} parent=0
    #allocation2 [shape = 'u8[262144]{0}', space=vmem, size = 0x40000, scoped, tag = 'output window, operand 0']
    #allocation3 [shape = 's32[2]{0}', space=sflag, size = 0x8, scoped, tag = 'scoped memory for fn.1']
    %8 = vsyncpa [#allocation3], 0
    %s9 = scalar_lea.sflag [#allocation3], 1
    %10 = vsyncpa %s9, 0
    loop: start=0, step=1, limit=51
    $region2: #{fn.1} parent=1 // loop_pre_header
      _
    $region3: #{fn.1} parent=1 // loop_header
      %s12 = sphi 0, %s16
      %p13 = scmp.ge.s32.totalorder %s12, 51
      %s19 = sphi 0, %s31
      %s20 = sphi 0, %s27
      %s21 = sphi 0, %s19
      %s22 = sphi 0, %s20
      %s23 = sphi 0, %s21
      %s24 = sphi 0, %s22
      %s34 = sphi 0, %s36
      %s37 = sphi 0, %s34
      %s38 = sphi 0, %s37
      %s54 = sphi 0, %s38
      %s60 = sphi 0, %s62
      %s63 = sphi 0, %s60
      %s64 = sphi 0, %s63
      %s80 = sphi 0, %s64
      %s86 = sphi 0, %s88
      %s89 = sphi 0, %s86
      %s90 = sphi 0, %s89
      %s106 = sphi 0, %s90
      %s114 = sphi 0, %s116
      %s117 = sphi 0, %s114
      %s118 = sphi 0, %s117
      %s134 = sphi 0, %s118
    $region4: #{fn.1} parent=1 // loop_header_branch
      %15 = sbr.rel (%p13) target = $region8
    $region5: #{fn.1} parent=1 // loop_body
      %s17 = ssub.s32 %s12, 1
      %s18 = ssub.s32 %s12, 2
      %s25 = sadd.s32 1, %s20
      %p26 = scmp.ge.s32.totalorder %s25, 1
      %s27 = scalar_select %p26, 0, %s25
      %s28 = sadd.s32 1, %s19
      %s29 = scalar_select %p26, %s28, %s19
      %p30 = scmp.ge.s32.totalorder %s29, 49
      %s31 = scalar_select %p30, 0, %s29
      %s32 = ssub.s32 %s19, %s31
      %p33 = scmp.eq.s32.totalorder %s32, 0
      %s35 = sadd.s32 %s34, 1
      %s36 = scalar_select %p33, %s34, %s35
      %p39 = pneg %p33
      %p40 = scmp.eq.s32.totalorder %s12, 48
      %p41 = por %p39, %p40
      %p42 = scmp.ne.s32.totalorder %s34, %s37
      %p43 = scmp.eq.s32.totalorder %s12, 0
      %p44 = por %p42, %p43
      %p45 = scmp.ne.s32.totalorder %s34, %s37
      %p46 = scmp.eq.s32.totalorder %s17, 48
      %p47 = por %p45, %p46
      %p48 = scmp.ne.s32.totalorder %s37, %s38
      %p49 = scmp.eq.s32.totalorder %s17, 0
      %p50 = por %p48, %p49
      %p51 = scmp.ne.s32.totalorder %s37, %s38
      %p52 = scmp.eq.s32.totalorder %s18, 48
      %p53 = por %p51, %p52
      %p55 = scmp.ne.s32.totalorder %s38, %s54
      %p56 = scmp.eq.s32.totalorder %s18, 0
      %p57 = por %p55, %p56
      %s58 = ssub.s32 %s20, %s27
      %p59 = scmp.eq.s32.totalorder %s58, 0
      %s61 = sadd.s32 %s60, 1
      %s62 = scalar_select %p59, %s60, %s61
      %p65 = pneg %p59
      %p66 = scmp.eq.s32.totalorder %s12, 48
      %p67 = por %p65, %p66
      %p68 = scmp.ne.s32.totalorder %s60, %s63
      %p69 = scmp.eq.s32.totalorder %s12, 0
      %p70 = por %p68, %p69
      %p71 = scmp.ne.s32.totalorder %s60, %s63
      %p72 = scmp.eq.s32.totalorder %s17, 48
      %p73 = por %p71, %p72
      %p74 = scmp.ne.s32.totalorder %s63, %s64
      %p75 = scmp.eq.s32.totalorder %s17, 0
      %p76 = por %p74, %p75
      %p77 = scmp.ne.s32.totalorder %s63, %s64
      %p78 = scmp.eq.s32.totalorder %s18, 48
      %p79 = por %p77, %p78
      %p81 = scmp.ne.s32.totalorder %s64, %s80
      %p82 = scmp.eq.s32.totalorder %s18, 0
      %p83 = por %p81, %p82
      %s84 = ssub.s32 %s20, %s27
      %p85 = scmp.eq.s32.totalorder %s84, 0
      %s87 = sadd.s32 %s86, 1
      %s88 = scalar_select %p85, %s86, %s87
      %p91 = pneg %p85
      %p92 = scmp.eq.s32.totalorder %s12, 48
      %p93 = por %p91, %p92
      %p94 = scmp.ne.s32.totalorder %s86, %s89
      %p95 = scmp.eq.s32.totalorder %s12, 0
      %p96 = por %p94, %p95
      %p97 = scmp.ne.s32.totalorder %s86, %s89
      %p98 = scmp.eq.s32.totalorder %s17, 48
      %p99 = por %p97, %p98
      %p100 = scmp.ne.s32.totalorder %s89, %s90
      %p101 = scmp.eq.s32.totalorder %s17, 0
      %p102 = por %p100, %p101
      %p103 = scmp.ne.s32.totalorder %s89, %s90
      %p104 = scmp.eq.s32.totalorder %s18, 48
      %p105 = por %p103, %p104
      %p107 = scmp.ne.s32.totalorder %s90, %s106
      %p108 = scmp.eq.s32.totalorder %s18, 0
      %p109 = por %p107, %p108
      %s110 = ssub.s32 %s19, %s31
      %s111 = ssub.s32 %s20, %s27
      %s112 = sor.u32 %s110, %s111
      %p113 = scmp.eq.s32.totalorder %s112, 0
      %s115 = sadd.s32 %s114, 1
      %s116 = scalar_select %p113, %s114, %s115
      %p119 = pneg %p113
      %p120 = scmp.eq.s32.totalorder %s12, 48
      %p121 = por %p119, %p120
      %p122 = scmp.ne.s32.totalorder %s114, %s117
      %p123 = scmp.eq.s32.totalorder %s12, 0
      %p124 = por %p122, %p123
      %p125 = scmp.ne.s32.totalorder %s114, %s117
      %p126 = scmp.eq.s32.totalorder %s17, 48
      %p127 = por %p125, %p126
      %p128 = scmp.ne.s32.totalorder %s117, %s118
      %p129 = scmp.eq.s32.totalorder %s17, 0
      %p130 = por %p128, %p129
      %p131 = scmp.ne.s32.totalorder %s117, %s118
      %p132 = scmp.eq.s32.totalorder %s18, 48
      %p133 = por %p131, %p132
      %p135 = scmp.ne.s32.totalorder %s118, %s134
      %p136 = scmp.eq.s32.totalorder %s18, 0
      %p137 = por %p135, %p136
      %p138 = scmp.le.s32.totalorder 1, %s12
      %p139 = scmp.lt.s32.totalorder %s12, 50
      %p140 = pnand %p138, %p139
      %p141 = pneg %p140
      // Predicated region
      $region9: #{fn.1} parent=5 // pred_check
        _
      $region10: #{fn.1} parent=5 // pred_check_branch
        %143 = sbr.rel (%p140) target = $region12
      $region11: #{fn.1} parent=5 // pred_region
        %s144 = ssub.s32 %s12, 1
        // Predicated region
        $region13: #{fn.1} parent=11 // pred_check
          %p145 = pneg %p76
        $region14: #{fn.1} parent=11 // pred_check_branch
          %147 = sbr.rel (%p145) target = $region16
        $region15: #{fn.1} parent=11 // pred_region
          %p148 = scmp.lt.s32.totalorder %s22, 0
          %s149 = scalar_select %p148, %s22, 0
          %s150 = smul.addr %s149, 4
          %s151 = scalar_lea.vmem %s1, %s150
        $region16: #{fn.1} parent=11 // pred_fallthru
          _
        // Predicated region
        $region17: #{fn.1} parent=11 // pred_check
          %p152 = pneg %p102
        $region18: #{fn.1} parent=11 // pred_check_branch
          %154 = sbr.rel (%p152) target = $region20
        $region19: #{fn.1} parent=11 // pred_region
          %p155 = scmp.lt.s32.totalorder %s22, 0
          %s156 = scalar_select %p155, %s22, 0
          %s157 = scalar_lea.vmem %s2, %s156
        $region20: #{fn.1} parent=11 // pred_fallthru
          _
      $region12: #{fn.1} parent=5 // pred_fallthru
        _
      %p158 = scmp.lt.s32.totalorder %s12, 49
      // Predicated region
      $region21: #{fn.1} parent=5 // pred_check
        %p159 = pneg %p158
      $region22: #{fn.1} parent=5 // pred_check_branch
        %161 = sbr.rel (%p159) target = $region24
      $region23: #{fn.1} parent=5 // pred_region
        // Predicated region
        $region25: #{fn.1} parent=23 // pred_check
          %p162 = pneg %p44
        $region26: #{fn.1} parent=23 // pred_check_branch
          %164 = sbr.rel (%p162) target = $region28
        $region27: #{fn.1} parent=23 // pred_region
          %s165 = smul.u32 64, %s19
          %p166 = scmp.lt.s32.totalorder %s165, 3135
          %s167 = scalar_select %p166, %s165, 3135
          %s168 = smul.addr %s167, 2
          %s169 = smul.addr %s168, 4
          %s170 = scalar_lea.vmem %s0, %s169
          %s171 = smul.u32 64, %s19
        $region28: #{fn.1} parent=23 // pred_fallthru
          _
      $region24: #{fn.1} parent=5 // pred_fallthru
        _
      %p172 = scmp.le.s32.totalorder 1, %s12
      %p173 = scmp.lt.s32.totalorder %s12, 50
      %p174 = pnand %p172, %p173
      %p175 = pneg %p174
      // Predicated region
      $region29: #{fn.1} parent=5 // pred_check
        _
      $region30: #{fn.1} parent=5 // pred_check_branch
        %177 = sbr.rel (%p174) target = $region32
      $region31: #{fn.1} parent=5 // pred_region
        %s178 = ssub.s32 %s12, 1
        %s179 = smul.u32 64, %s21
        %p180 = scmp.lt.s32.totalorder %s179, 3135
        %s181 = scalar_select %p180, %s179, 3135
        %s182 = smul.addr %s181, 2
        %s183 = smul.addr %s182, 4
        %s184 = scalar_lea.vmem %s0, %s183
        %p185 = pneg %p50
        %p186 = pneg %p47
        %p187 = scmp.lt.s32.totalorder %s22, 0
        %s188 = scalar_select %p187, %s22, 0
        %s189 = smul.addr %s188, 4
        %s190 = scalar_lea.vmem %s1, %s189
        %p191 = pneg %p76
        %p192 = pneg %p73
        %p193 = scmp.lt.s32.totalorder %s22, 0
        %s194 = scalar_select %p193, %s22, 0
        %s195 = scalar_lea.vmem %s2, %s194
        %p196 = pneg %p102
        %p197 = pneg %p99
        %p198 = pneg %p130
        %p199 = pneg %p127
        %s200 = sand.u32 %s117, 1
        %s201 = scalar_lea.sflag [#allocation3], %s200
        %s202 = sand.u32 %s117, 1
        %s203 = smul.addr %s202, 256
        %s204 = scalar_lea.vmem [#allocation2], %s203
        %s205 = smul.u32 64, %s21
        %p206 = scmp.lt.s32.totalorder %s205, 3135
        %s207 = scalar_select %p206, %s205, 3135
        %s208 = smul.addr %s207, 2
        %s209 = smul.addr %s208, 4
        %s210 = scalar_lea.vmem %s0, %s209
        %s211 = smul.u32 64, %s21
        %p212 = scmp.lt.s32.totalorder %s22, 0
        %s213 = scalar_select %p212, %s22, 0
        %s214 = smul.addr %s213, 4
        %s215 = scalar_lea.vmem %s1, %s214
        %p216 = scmp.lt.s32.totalorder %s22, 0
        %s217 = scalar_select %p216, %s22, 0
        %s218 = scalar_lea.vmem %s2, %s217
        %s219 = smul.u32 64, %s21
        %v221 = vld [vmem:[%s210] sm:$0xff]
        %v222 = vld [vmem:[%s210 + $0x8] sm:$0xff]
        %v223 = vld [vmem:[%s210 + $0x10] sm:$0xff]
        %v224 = vld [vmem:[%s210 + $0x18] sm:$0xff]
        %v225 = vld [vmem:[%s210 + $0x20] sm:$0xff]
        %v226 = vld [vmem:[%s210 + $0x28] sm:$0xff]
        %v227 = vld [vmem:[%s210 + $0x30] sm:$0xff]
        %v228 = vld [vmem:[%s210 + $0x38] sm:$0xff]
        %v229 = vld [vmem:[%s210 + $0x40] sm:$0xff]
        %v230 = vld [vmem:[%s210 + $0x48] sm:$0xff]
        %v231 = vld [vmem:[%s210 + $0x50] sm:$0xff]
        %v232 = vld [vmem:[%s210 + $0x58] sm:$0xff]
        %v233 = vld [vmem:[%s210 + $0x60] sm:$0xff]
        %v234 = vld [vmem:[%s210 + $0x68] sm:$0xff]
        %v235 = vld [vmem:[%s210 + $0x70] sm:$0xff]
        %v236 = vld [vmem:[%s210 + $0x78] sm:$0xff]
        %v237 = vld [vmem:[%s210 + $0x80] sm:$0xff]
        %v238 = vld [vmem:[%s210 + $0x88] sm:$0xff]
        %v239 = vld [vmem:[%s210 + $0x90] sm:$0xff]
        %v240 = vld [vmem:[%s210 + $0x98] sm:$0xff]
        %v241 = vld [vmem:[%s210 + $0xa0] sm:$0xff]
        %v242 = vld [vmem:[%s210 + $0xa8] sm:$0xff]
        %v243 = vld [vmem:[%s210 + $0xb0] sm:$0xff]
        %v244 = vld [vmem:[%s210 + $0xb8] sm:$0xff]
        %v245 = vld [vmem:[%s210 + $0xc0] sm:$0xff]
        %v246 = vld [vmem:[%s210 + $0xc8] sm:$0xff]
        %v247 = vld [vmem:[%s210 + $0xd0] sm:$0xff]
        %v248 = vld [vmem:[%s210 + $0xd8] sm:$0xff]
        %v249 = vld [vmem:[%s210 + $0xe0] sm:$0xff]
        %v250 = vld [vmem:[%s210 + $0xe8] sm:$0xff]
        %v251 = vld [vmem:[%s210 + $0xf0] sm:$0xff]
        %v252 = vld [vmem:[%s210 + $0xf8] sm:$0xff]
        %v253 = vld [vmem:[%s210 + $0x100] sm:$0xff]
        %v254 = vld [vmem:[%s210 + $0x108] sm:$0xff]
        %v255 = vld [vmem:[%s210 + $0x110] sm:$0xff]
        %v256 = vld [vmem:[%s210 + $0x118] sm:$0xff]
        %v257 = vld [vmem:[%s210 + $0x120] sm:$0xff]
        %v258 = vld [vmem:[%s210 + $0x128] sm:$0xff]
        %v259 = vld [vmem:[%s210 + $0x130] sm:$0xff]
        %v260 = vld [vmem:[%s210 + $0x138] sm:$0xff]
        %v261 = vld [vmem:[%s210 + $0x140] sm:$0xff]
        %v262 = vld [vmem:[%s210 + $0x148] sm:$0xff]
        %v263 = vld [vmem:[%s210 + $0x150] sm:$0xff]
        %v264 = vld [vmem:[%s210 + $0x158] sm:$0xff]
        %v265 = vld [vmem:[%s210 + $0x160] sm:$0xff]
        %v266 = vld [vmem:[%s210 + $0x168] sm:$0xff]
        %v267 = vld [vmem:[%s210 + $0x170] sm:$0xff]
        %v268 = vld [vmem:[%s210 + $0x178] sm:$0xff]
        %v269 = vld [vmem:[%s210 + $0x180] sm:$0xff]
        %v270 = vld [vmem:[%s210 + $0x188] sm:$0xff]
        %v271 = vld [vmem:[%s210 + $0x190] sm:$0xff]
        %v272 = vld [vmem:[%s210 + $0x198] sm:$0xff]
        %v273 = vld [vmem:[%s210 + $0x1a0] sm:$0xff]
        %v274 = vld [vmem:[%s210 + $0x1a8] sm:$0xff]
        %v275 = vld [vmem:[%s210 + $0x1b0] sm:$0xff]
        %v276 = vld [vmem:[%s210 + $0x1b8] sm:$0xff]
        %v277 = vld [vmem:[%s210 + $0x1c0] sm:$0xff]
        %v278 = vld [vmem:[%s210 + $0x1c8] sm:$0xff]
        %v279 = vld [vmem:[%s210 + $0x1d0] sm:$0xff]
        %v280 = vld [vmem:[%s210 + $0x1d8] sm:$0xff]
        %v281 = vld [vmem:[%s210 + $0x1e0] sm:$0xff]
        %v282 = vld [vmem:[%s210 + $0x1e8] sm:$0xff]
        %v283 = vld [vmem:[%s210 + $0x1f0] sm:$0xff]
        %v284 = vld [vmem:[%s210 + $0x1f8] sm:$0xff]
        %v285 = vld [vmem:[%s215] sm:$0xf]
        %v286 = vld [vmem:[%s215 + $0x4] sm:$0xf]
        %v287 = vld [vmem:[%s215 + $0x8] sm:$0xf]
        %v288 = vld [vmem:[%s215 + $0xc] sm:$0xf]
        %v289 = vld [vmem:[%s215 + $0x10] sm:$0xf]
        %v290 = vld [vmem:[%s215 + $0x14] sm:$0xf]
        %v291 = vld [vmem:[%s215 + $0x18] sm:$0xf]
        %v292 = vld [vmem:[%s215 + $0x1c] sm:$0xf]
        %v293 = vld [vmem:[%s215 + $0x20] sm:$0xf]
        %v294 = vld [vmem:[%s215 + $0x24] sm:$0xf]
        %v295 = vld [vmem:[%s215 + $0x28] sm:$0xf]
        %v296 = vld [vmem:[%s215 + $0x2c] sm:$0xf]
        %v297 = vld [vmem:[%s215 + $0x30] sm:$0xf]
        %v298 = vld [vmem:[%s215 + $0x34] sm:$0xf]
        %v299 = vld [vmem:[%s215 + $0x38] sm:$0xf]
        %v300 = vld [vmem:[%s215 + $0x3c] sm:$0xf]
        %v301 = vld [vmem:[%s215 + $0x40] sm:$0xf]
        %v302 = vld [vmem:[%s215 + $0x44] sm:$0xf]
        %v303 = vld [vmem:[%s215 + $0x48] sm:$0xf]
        %v304 = vld [vmem:[%s215 + $0x4c] sm:$0xf]
        %v305 = vld [vmem:[%s218] sm:$0x1]
        %v307 = vlaneseq
        %v308 = vshrl.u32 %v307, 7
        %v309 = vsub.s32 0, %v308
        %v310 = vrot.slane %v305, %v309
        %v376 = vunpack.c.l.b16 %v221
        %v377 = vunpack.c.h.b16 %v221
        %v378 = vunpack.c.l.b16 %v222
        %v379 = vunpack.c.h.b16 %v222
        %v380 = vunpack.c.l.b16 %v223
        %v381 = vunpack.c.h.b16 %v223
        %v382 = vunpack.c.l.b16 %v224
        %v383 = vunpack.c.h.b16 %v224
        %v384 = vunpack.c.l.b16 %v225
        %v385 = vunpack.c.h.b16 %v225
        %v386 = vunpack.c.l.b16 %v226
        %v387 = vunpack.c.h.b16 %v226
        %v388 = vunpack.c.l.b16 %v227
        %v389 = vunpack.c.h.b16 %v227
        %v390 = vunpack.c.l.b16 %v228
        %v391 = vunpack.c.h.b16 %v228
        %v392 = vunpack.c.l.b16 %v229
        %v393 = vunpack.c.h.b16 %v229
        %v394 = vunpack.c.l.b16 %v230
        %v395 = vunpack.c.h.b16 %v230
        %v396 = vunpack.c.l.b16 %v231
        %v397 = vunpack.c.h.b16 %v231
        %v398 = vunpack.c.l.b16 %v232
        %v399 = vunpack.c.h.b16 %v232
        %v400 = vunpack.c.l.b16 %v233
        %v401 = vunpack.c.h.b16 %v233
        %v402 = vunpack.c.l.b16 %v234
        %v403 = vunpack.c.h.b16 %v234
        %v404 = vunpack.c.l.b16 %v235
        %v405 = vunpack.c.h.b16 %v235
        %v406 = vunpack.c.l.b16 %v236
        %v407 = vunpack.c.h.b16 %v236
        %v408 = vunpack.c.l.b16 %v237
        %v409 = vunpack.c.h.b16 %v237
        %v410 = vunpack.c.l.b16 %v238
        %v411 = vunpack.c.h.b16 %v238
        %v412 = vunpack.c.l.b16 %v239
        %v413 = vunpack.c.h.b16 %v239
        %v414 = vunpack.c.l.b16 %v240
        %v415 = vunpack.c.h.b16 %v240
        %v416 = vunpack.c.l.b16 %v241
        %v417 = vunpack.c.h.b16 %v241
        %v418 = vunpack.c.l.b16 %v242
        %v419 = vunpack.c.h.b16 %v242
        %v420 = vunpack.c.l.b16 %v243
        %v421 = vunpack.c.h.b16 %v243
        %v422 = vunpack.c.l.b16 %v244
        %v423 = vunpack.c.h.b16 %v244
        %v424 = vunpack.c.l.b16 %v245
        %v425 = vunpack.c.h.b16 %v245
        %v426 = vunpack.c.l.b16 %v246
        %v427 = vunpack.c.h.b16 %v246
        %v428 = vunpack.c.l.b16 %v247
        %v429 = vunpack.c.h.b16 %v247
        %v430 = vunpack.c.l.b16 %v248
        %v431 = vunpack.c.h.b16 %v248
        %v432 = vunpack.c.l.b16 %v249
        %v433 = vunpack.c.h.b16 %v249
        %v434 = vunpack.c.l.b16 %v250
        %v435 = vunpack.c.h.b16 %v250
        %v436 = vunpack.c.l.b16 %v251
        %v437 = vunpack.c.h.b16 %v251
        %v438 = vunpack.c.l.b16 %v252
        %v439 = vunpack.c.h.b16 %v252
        %v440 = vunpack.c.l.b16 %v253
        %v441 = vunpack.c.h.b16 %v253
        %v442 = vunpack.c.l.b16 %v254
        %v443 = vunpack.c.h.b16 %v254
        %v444 = vunpack.c.l.b16 %v255
        %v445 = vunpack.c.h.b16 %v255
        %v446 = vunpack.c.l.b16 %v256
        %v447 = vunpack.c.h.b16 %v256
        %v448 = vunpack.c.l.b16 %v257
        %v449 = vunpack.c.h.b16 %v257
        %v450 = vunpack.c.l.b16 %v258
        %v451 = vunpack.c.h.b16 %v258
        %v452 = vunpack.c.l.b16 %v259
        %v453 = vunpack.c.h.b16 %v259
        %v454 = vunpack.c.l.b16 %v260
        %v455 = vunpack.c.h.b16 %v260
        %v456 = vunpack.c.l.b16 %v261
        %v457 = vunpack.c.h.b16 %v261
        %v458 = vunpack.c.l.b16 %v262
        %v459 = vunpack.c.h.b16 %v262
        %v460 = vunpack.c.l.b16 %v263
        %v461 = vunpack.c.h.b16 %v263
        %v462 = vunpack.c.l.b16 %v264
        %v463 = vunpack.c.h.b16 %v264
        %v464 = vunpack.c.l.b16 %v265
        %v465 = vunpack.c.h.b16 %v265
        %v466 = vunpack.c.l.b16 %v266
        %v467 = vunpack.c.h.b16 %v266
        %v468 = vunpack.c.l.b16 %v267
        %v469 = vunpack.c.h.b16 %v267
        %v470 = vunpack.c.l.b16 %v268
        %v471 = vunpack.c.h.b16 %v268
        %v472 = vunpack.c.l.b16 %v269
        %v473 = vunpack.c.h.b16 %v269
        %v474 = vunpack.c.l.b16 %v270
        %v475 = vunpack.c.h.b16 %v270
        %v476 = vunpack.c.l.b16 %v271
        %v477 = vunpack.c.h.b16 %v271
        %v478 = vunpack.c.l.b16 %v272
        %v479 = vunpack.c.h.b16 %v272
        %v480 = vunpack.c.l.b16 %v273
        %v481 = vunpack.c.h.b16 %v273
        %v482 = vunpack.c.l.b16 %v274
        %v483 = vunpack.c.h.b16 %v274
        %v484 = vunpack.c.l.b16 %v275
        %v485 = vunpack.c.h.b16 %v275
        %v486 = vunpack.c.l.b16 %v276
        %v487 = vunpack.c.h.b16 %v276
        %v488 = vunpack.c.l.b16 %v277
        %v489 = vunpack.c.h.b16 %v277
        %v490 = vunpack.c.l.b16 %v278
        %v491 = vunpack.c.h.b16 %v278
        %v492 = vunpack.c.l.b16 %v279
        %v493 = vunpack.c.h.b16 %v279
        %v494 = vunpack.c.l.b16 %v280
        %v495 = vunpack.c.h.b16 %v280
        %v496 = vunpack.c.l.b16 %v281
        %v497 = vunpack.c.h.b16 %v281
        %v498 = vunpack.c.l.b16 %v282
        %v499 = vunpack.c.h.b16 %v282
        %v500 = vunpack.c.l.b16 %v283
        %v501 = vunpack.c.h.b16 %v283
        %v502 = vunpack.c.l.b16 %v284
        %v503 = vunpack.c.h.b16 %v284
        %v504 = vpack.c.b16 %v378, %v376
        %v505 = vpack.c.b16 %v379, %v377
        %v506 = vpack.c.b16 %v382, %v380
        %v507 = vpack.c.b16 %v383, %v381
        %v508 = vpack.c.b16 %v386, %v384
        %v509 = vpack.c.b16 %v387, %v385
        %v510 = vpack.c.b16 %v390, %v388
        %v511 = vpack.c.b16 %v391, %v389
        %v512 = vpack.c.b16 %v394, %v392
        %v513 = vpack.c.b16 %v395, %v393
        %v514 = vpack.c.b16 %v398, %v396
        %v515 = vpack.c.b16 %v399, %v397
        %v516 = vpack.c.b16 %v402, %v400
        %v517 = vpack.c.b16 %v403, %v401
        %v518 = vpack.c.b16 %v406, %v404
        %v519 = vpack.c.b16 %v407, %v405
        %v520 = vpack.c.b16 %v410, %v408
        %v521 = vpack.c.b16 %v411, %v409
        %v522 = vpack.c.b16 %v414, %v412
        %v523 = vpack.c.b16 %v415, %v413
        %v524 = vpack.c.b16 %v418, %v416
        %v525 = vpack.c.b16 %v419, %v417
        %v526 = vpack.c.b16 %v422, %v420
        %v527 = vpack.c.b16 %v423, %v421
        %v528 = vpack.c.b16 %v426, %v424
        %v529 = vpack.c.b16 %v427, %v425
        %v530 = vpack.c.b16 %v430, %v428
        %v531 = vpack.c.b16 %v431, %v429
        %v532 = vpack.c.b16 %v434, %v432
        %v533 = vpack.c.b16 %v435, %v433
        %v534 = vpack.c.b16 %v438, %v436
        %v535 = vpack.c.b16 %v439, %v437
        %v536 = vpack.c.b16 %v442, %v440
        %v537 = vpack.c.b16 %v443, %v441
        %v538 = vpack.c.b16 %v446, %v444
        %v539 = vpack.c.b16 %v447, %v445
        %v540 = vpack.c.b16 %v450, %v448
        %v541 = vpack.c.b16 %v451, %v449
        %v542 = vpack.c.b16 %v454, %v452
        %v543 = vpack.c.b16 %v455, %v453
        %v544 = vpack.c.b16 %v458, %v456
        %v545 = vpack.c.b16 %v459, %v457
        %v546 = vpack.c.b16 %v462, %v460
        %v547 = vpack.c.b16 %v463, %v461
        %v548 = vpack.c.b16 %v466, %v464
        %v549 = vpack.c.b16 %v467, %v465
        %v550 = vpack.c.b16 %v470, %v468
        %v551 = vpack.c.b16 %v471, %v469
        %v552 = vpack.c.b16 %v474, %v472
        %v553 = vpack.c.b16 %v475, %v473
        %v554 = vpack.c.b16 %v478, %v476
        %v555 = vpack.c.b16 %v479, %v477
        %v556 = vpack.c.b16 %v482, %v480
        %v557 = vpack.c.b16 %v483, %v481
        %v558 = vpack.c.b16 %v486, %v484
        %v559 = vpack.c.b16 %v487, %v485
        %v560 = vpack.c.b16 %v490, %v488
        %v561 = vpack.c.b16 %v491, %v489
        %v562 = vpack.c.b16 %v494, %v492
        %v563 = vpack.c.b16 %v495, %v493
        %v564 = vpack.c.b16 %v498, %v496
        %v565 = vpack.c.b16 %v499, %v497
        %v566 = vpack.c.b16 %v502, %v500
        %v567 = vpack.c.b16 %v503, %v501
        %v620 = vunpack.c.l.b16 %v285
        %v621 = vunpack.c.l.b16 %v286
        %v622 = vunpack.c.l.b16 %v287
        %v623 = vunpack.c.l.b16 %v288
        %v624 = vunpack.c.l.b16 %v289
        %v625 = vunpack.c.l.b16 %v290
        %v626 = vunpack.c.l.b16 %v291
        %v627 = vunpack.c.l.b16 %v292
        %v628 = vunpack.c.l.b16 %v293
        %v629 = vunpack.c.l.b16 %v294
        %v630 = vunpack.c.l.b16 %v295
        %v631 = vunpack.c.l.b16 %v296
        %v632 = vunpack.c.l.b16 %v297
        %v633 = vunpack.c.l.b16 %v298
        %v634 = vunpack.c.l.b16 %v299
        %v635 = vunpack.c.l.b16 %v300
        %v636 = vunpack.c.l.b16 %v301
        %v637 = vunpack.c.l.b16 %v302
        %v638 = vunpack.c.l.b16 %v303
        %v639 = vunpack.c.l.b16 %v304
        %v640 = vpack.c.b16 %v621, %v620
        %v641 = vpack.c.b16 %v623, %v622
        %v642 = vpack.c.b16 %v625, %v624
        %v643 = vpack.c.b16 %v627, %v626
        %v644 = vpack.c.b16 %v629, %v628
        %v645 = vpack.c.b16 %v631, %v630
        %v646 = vpack.c.b16 %v633, %v632
        %v647 = vpack.c.b16 %v635, %v634
        %v648 = vpack.c.b16 %v637, %v636
        %v649 = vpack.c.b16 %v639, %v638
        %vm660 = vcmask 261120
        %v662 = vsel %vm660, %v505, 0
        %v665 = vsel %vm660, %v507, 0
        %v668 = vsel %vm660, %v509, 0
        %v671 = vsel %vm660, %v511, 0
        %v674 = vsel %vm660, %v513, 0
        %v677 = vsel %vm660, %v515, 0
        %v680 = vsel %vm660, %v517, 0
        %v683 = vsel %vm660, %v519, 0
        %v686 = vsel %vm660, %v521, 0
        %v689 = vsel %vm660, %v523, 0
        %v692 = vsel %vm660, %v525, 0
        %v695 = vsel %vm660, %v527, 0
        %v698 = vsel %vm660, %v529, 0
        %v701 = vsel %vm660, %v531, 0
        %v704 = vsel %vm660, %v533, 0
        %v707 = vsel %vm660, %v535, 0
        %v710 = vsel %vm660, %v537, 0
        %v713 = vsel %vm660, %v539, 0
        %v716 = vsel %vm660, %v541, 0
        %v719 = vsel %vm660, %v543, 0
        %v722 = vsel %vm660, %v545, 0
        %v725 = vsel %vm660, %v547, 0
        %v728 = vsel %vm660, %v549, 0
        %v731 = vsel %vm660, %v551, 0
        %v734 = vsel %vm660, %v553, 0
        %v737 = vsel %vm660, %v555, 0
        %v740 = vsel %vm660, %v557, 0
        %v743 = vsel %vm660, %v559, 0
        %v746 = vsel %vm660, %v561, 0
        %v749 = vsel %vm660, %v563, 0
        %v752 = vsel %vm660, %v565, 0
        %v755 = vsel %vm660, %v567, 0
        %757 = vmatprep.subr.bf16.mxu0 0
        %758 = vmatpush1.bf16.msra.mxu0 %v640
        %759 = vmatprep.subr.bf16.mxu0 0
        %760 = vmatpush1.bf16.msra.mxu0 %v641
        %761 = vmatprep.subr.bf16.mxu0 0
        %762 = vmatpush1.bf16.msra.mxu0 %v642
        %763 = vmatprep.subr.bf16.mxu0 0
        %764 = vmatpush1.bf16.msra.mxu0 %v643
        %765 = vmatprep.subr.bf16.mxu0 0
        %766 = vmatpush1.bf16.msra.mxu0 %v644
        %767 = vmatprep.subr.bf16.mxu0 0
        %768 = vmatpush1.bf16.msra.mxu0 %v645
        %769 = vmatprep.subr.bf16.mxu0 0
        %770 = vmatpush1.bf16.msra.mxu0 %v646
        %771 = vmatprep.subr.bf16.mxu0 0
        %772 = vmatpush1.bf16.msra.mxu0 %v647
        %773 = vmatprep.subr.bf16.mxu0 0
        %774 = vmatpush1.bf16.msra.mxu0 %v648
        %775 = vmatprep.subr.bf16.mxu0 0
        %776 = vmatpush1.bf16.msra.mxu0 %v649
        %777 = vmatprep.subr.bf16.mxu0 0
        %778 = vmatpush1.bf16.msra.mxu0 0
        %779 = vmatprep.subr.bf16.mxu0 0
        %780 = vmatpush1.bf16.msra.mxu0 0
        %781 = vmatprep.subr.bf16.mxu0 0
        %782 = vmatpush1.bf16.msra.mxu0 0
        %783 = vmatprep.subr.bf16.mxu0 0
        %784 = vmatpush1.bf16.msra.mxu0 0
        %785 = vmatprep.subr.bf16.mxu0 0
        %786 = vmatpush1.bf16.msra.mxu0 0
        %787 = vmatprep.subr.bf16.mxu0 0
        %788 = vmatpush1.bf16.msra.mxu0 0
        %789 = vmatprep.mubr.bf16.mxu0 %v662
        %790 = vmatmul.mubr.bf16.gmra.mrb[0].mxu0 %v504
        %v791 = vpop.f32.mrb[0].mxu0
        %v792 = vadd.f32 %v310, %v791
        %v793 = vpop.f32.mrb[0].mxu0
        %v794 = vpop.f32.mrb[0].mxu0
        %v795 = vadd.f32 %v310, %v794
        %v796 = vpop.f32.mrb[0].mxu0
        %797 = vmatprep.mubr.bf16.mxu0 %v665
        %798 = vmatmul.mubr.bf16.gmra.mrb[0].mxu0 %v506
        %v799 = vpop.f32.mrb[0].mxu0
        %v800 = vadd.f32 %v310, %v799
        %v801 = vpop.f32.mrb[0].mxu0
        %v802 = vpop.f32.mrb[0].mxu0
        %v803 = vadd.f32 %v310, %v802
        %v804 = vpop.f32.mrb[0].mxu0
        %805 = vmatprep.mubr.bf16.mxu0 %v668
        %806 = vmatmul.mubr.bf16.gmra.mrb[0].mxu0 %v508
        %v807 = vpop.f32.mrb[0].mxu0
        %v808 = vadd.f32 %v310, %v807
        %v809 = vpop.f32.mrb[0].mxu0
        %v810 = vpop.f32.mrb[0].mxu0
        %v811 = vadd.f32 %v310, %v810
        %v812 = vpop.f32.mrb[0].mxu0
        %813 = vmatprep.mubr.bf16.mxu0 %v671
        %814 = vmatmul.mubr.bf16.gmra.mrb[0].mxu0 %v510
        %v815 = vpop.f32.mrb[0].mxu0
        %v816 = vadd.f32 %v310, %v815
        %v817 = vpop.f32.mrb[0].mxu0
        %v818 = vpop.f32.mrb[0].mxu0
        %v819 = vadd.f32 %v310, %v818
        %v820 = vpop.f32.mrb[0].mxu0
        %821 = vmatprep.mubr.bf16.mxu0 %v674
        %822 = vmatmul.mubr.bf16.gmra.mrb[0].mxu0 %v512
        %v823 = vpop.f32.mrb[0].mxu0
        %v824 = vadd.f32 %v310, %v823
        %v825 = vpop.f32.mrb[0].mxu0
        %v826 = vpop.f32.mrb[0].mxu0
        %v827 = vadd.f32 %v310, %v826
        %v828 = vpop.f32.mrb[0].mxu0
        %829 = vmatprep.mubr.bf16.mxu0 %v677
        %830 = vmatmul.mubr.bf16.gmra.mrb[0].mxu0 %v514
        %v831 = vpop.f32.mrb[0].mxu0
        %v832 = vadd.f32 %v310, %v831
        %v833 = vpop.f32.mrb[0].mxu0
        %v834 = vpop.f32.mrb[0].mxu0
        %v835 = vadd.f32 %v310, %v834
        %v836 = vpop.f32.mrb[0].mxu0
        %837 = vmatprep.mubr.bf16.mxu0 %v680
        %838 = vmatmul.mubr.bf16.gmra.mrb[0].mxu0 %v516
        %v839 = vpop.f32.mrb[0].mxu0
        %v840 = vadd.f32 %v310, %v839
        %v841 = vpop.f32.mrb[0].mxu0
        %v842 = vpop.f32.mrb[0].mxu0
        %v843 = vadd.f32 %v310, %v842
        %v844 = vpop.f32.mrb[0].mxu0
        %845 = vmatprep.mubr.bf16.mxu0 %v683
        %846 = vmatmul.mubr.bf16.gmra.mrb[0].mxu0 %v518
        %v847 = vpop.f32.mrb[0].mxu0
        %v848 = vadd.f32 %v310, %v847
        %v849 = vpop.f32.mrb[0].mxu0
        %v850 = vpop.f32.mrb[0].mxu0
        %v851 = vadd.f32 %v310, %v850
        %v852 = vpop.f32.mrb[0].mxu0
        %853 = vmatprep.mubr.bf16.mxu0 %v686
        %854 = vmatmul.mubr.bf16.gmra.mrb[0].mxu0 %v520
        %v855 = vpop.f32.mrb[0].mxu0
        %v856 = vadd.f32 %v310, %v855
        %v857 = vpop.f32.mrb[0].mxu0
        %v858 = vpop.f32.mrb[0].mxu0
        %v859 = vadd.f32 %v310, %v858
        %v860 = vpop.f32.mrb[0].mxu0
        %861 = vmatprep.mubr.bf16.mxu0 %v689
        %862 = vmatmul.mubr.bf16.gmra.mrb[0].mxu0 %v522
        %v863 = vpop.f32.mrb[0].mxu0
        %v864 = vadd.f32 %v310, %v863
        %v865 = vpop.f32.mrb[0].mxu0
        %v866 = vpop.f32.mrb[0].mxu0
        %v867 = vadd.f32 %v310, %v866
        %v868 = vpop.f32.mrb[0].mxu0
        %869 = vmatprep.mubr.bf16.mxu0 %v692
        %870 = vmatmul.mubr.bf16.gmra.mrb[0].mxu0 %v524
        %v871 = vpop.f32.mrb[0].mxu0
        %v872 = vadd.f32 %v310, %v871
        %v873 = vpop.f32.mrb[0].mxu0
        %v874 = vpop.f32.mrb[0].mxu0
        %v875 = vadd.f32 %v310, %v874
        %v876 = vpop.f32.mrb[0].mxu0
        %877 = vmatprep.mubr.bf16.mxu0 %v695
        %878 = vmatmul.mubr.bf16.gmra.mrb[0].mxu0 %v526
        %v879 = vpop.f32.mrb[0].mxu0
        %v880 = vadd.f32 %v310, %v879
        %v881 = vpop.f32.mrb[0].mxu0
        %v882 = vpop.f32.mrb[0].mxu0
        %v883 = vadd.f32 %v310, %v882
        %v884 = vpop.f32.mrb[0].mxu0
        %885 = vmatprep.mubr.bf16.mxu0 %v698
        %886 = vmatmul.mubr.bf16.gmra.mrb[0].mxu0 %v528
        %v887 = vpop.f32.mrb[0].mxu0
        %v888 = vadd.f32 %v310, %v887
        %v889 = vpop.f32.mrb[0].mxu0
        %v890 = vpop.f32.mrb[0].mxu0
        %v891 = vadd.f32 %v310, %v890
        %v892 = vpop.f32.mrb[0].mxu0
        %893 = vmatprep.mubr.bf16.mxu0 %v701
        %894 = vmatmul.mubr.bf16.gmra.mrb[0].mxu0 %v530
        %v895 = vpop.f32.mrb[0].mxu0
        %v896 = vadd.f32 %v310, %v895
        %v897 = vpop.f32.mrb[0].mxu0
        %v898 = vpop.f32.mrb[0].mxu0
        %v899 = vadd.f32 %v310, %v898
        %v900 = vpop.f32.mrb[0].mxu0
        %901 = vmatprep.mubr.bf16.mxu0 %v704
        %902 = vmatmul.mubr.bf16.gmra.mrb[0].mxu0 %v532
        %v903 = vpop.f32.mrb[0].mxu0
        %v904 = vadd.f32 %v310, %v903
        %v905 = vpop.f32.mrb[0].mxu0
        %v906 = vpop.f32.mrb[0].mxu0
        %v907 = vadd.f32 %v310, %v906
        %v908 = vpop.f32.mrb[0].mxu0
        %909 = vmatprep.mubr.bf16.mxu0 %v707
        %910 = vmatmul.mubr.bf16.gmra.mrb[0].mxu0 %v534
        %v911 = vpop.f32.mrb[0].mxu0
        %v912 = vadd.f32 %v310, %v911
        %v913 = vpop.f32.mrb[0].mxu0
        %v914 = vpop.f32.mrb[0].mxu0
        %v915 = vadd.f32 %v310, %v914
        %v916 = vpop.f32.mrb[0].mxu0
        %917 = vmatprep.mubr.bf16.mxu0 %v710
        %918 = vmatmul.mubr.bf16.gmra.mrb[0].mxu0 %v536
        %v919 = vpop.f32.mrb[0].mxu0
        %v920 = vadd.f32 %v310, %v919
        %v921 = vpop.f32.mrb[0].mxu0
        %v922 = vpop.f32.mrb[0].mxu0
        %v923 = vadd.f32 %v310, %v922
        %v924 = vpop.f32.mrb[0].mxu0
        %925 = vmatprep.mubr.bf16.mxu0 %v713
        %926 = vmatmul.mubr.bf16.gmra.mrb[0].mxu0 %v538
        %v927 = vpop.f32.mrb[0].mxu0
        %v928 = vadd.f32 %v310, %v927
        %v929 = vpop.f32.mrb[0].mxu0
        %v930 = vpop.f32.mrb[0].mxu0
        %v931 = vadd.f32 %v310, %v930
        %v932 = vpop.f32.mrb[0].mxu0
        %933 = vmatprep.mubr.bf16.mxu0 %v716
        %934 = vmatmul.mubr.bf16.gmra.mrb[0].mxu0 %v540
        %v935 = vpop.f32.mrb[0].mxu0
        %v936 = vadd.f32 %v310, %v935
        %v937 = vpop.f32.mrb[0].mxu0
        %v938 = vpop.f32.mrb[0].mxu0
        %v939 = vadd.f32 %v310, %v938
        %v940 = vpop.f32.mrb[0].mxu0
        %941 = vmatprep.mubr.bf16.mxu0 %v719
        %942 = vmatmul.mubr.bf16.gmra.mrb[0].mxu0 %v542
        %v943 = vpop.f32.mrb[0].mxu0
        %v944 = vadd.f32 %v310, %v943
        %v945 = vpop.f32.mrb[0].mxu0
        %v946 = vpop.f32.mrb[0].mxu0
        %v947 = vadd.f32 %v310, %v946
        %v948 = vpop.f32.mrb[0].mxu0
        %949 = vmatprep.mubr.bf16.mxu0 %v722
        %950 = vmatmul.mubr.bf16.gmra.mrb[0].mxu0 %v544
        %v951 = vpop.f32.mrb[0].mxu0
        %v952 = vadd.f32 %v310, %v951
        %v953 = vpop.f32.mrb[0].mxu0
        %v954 = vpop.f32.mrb[0].mxu0
        %v955 = vadd.f32 %v310, %v954
        %v956 = vpop.f32.mrb[0].mxu0
        %957 = vmatprep.mubr.bf16.mxu0 %v725
        %958 = vmatmul.mubr.bf16.gmra.mrb[0].mxu0 %v546
        %v959 = vpop.f32.mrb[0].mxu0
        %v960 = vadd.f32 %v310, %v959
        %v961 = vpop.f32.mrb[0].mxu0
        %v962 = vpop.f32.mrb[0].mxu0
        %v963 = vadd.f32 %v310, %v962
        %v964 = vpop.f32.mrb[0].mxu0
        %965 = vmatprep.mubr.bf16.mxu0 %v728
        %966 = vmatmul.mubr.bf16.gmra.mrb[0].mxu0 %v548
        %v967 = vpop.f32.mrb[0].mxu0
        %v968 = vadd.f32 %v310, %v967
        %v969 = vpop.f32.mrb[0].mxu0
        %v970 = vpop.f32.mrb[0].mxu0
        %v971 = vadd.f32 %v310, %v970
        %v972 = vpop.f32.mrb[0].mxu0
        %973 = vmatprep.mubr.bf16.mxu0 %v731
        %974 = vmatmul.mubr.bf16.gmra.mrb[0].mxu0 %v550
        %v975 = vpop.f32.mrb[0].mxu0
        %v976 = vadd.f32 %v310, %v975
        %v977 = vpop.f32.mrb[0].mxu0
        %v978 = vpop.f32.mrb[0].mxu0
        %v979 = vadd.f32 %v310, %v978
        %v980 = vpop.f32.mrb[0].mxu0
        %981 = vmatprep.mubr.bf16.mxu0 %v734
        %982 = vmatmul.mubr.bf16.gmra.mrb[0].mxu0 %v552
        %v983 = vpop.f32.mrb[0].mxu0
        %v984 = vadd.f32 %v310, %v983
        %v985 = vpop.f32.mrb[0].mxu0
        %v986 = vpop.f32.mrb[0].mxu0
        %v987 = vadd.f32 %v310, %v986
        %v988 = vpop.f32.mrb[0].mxu0
        %989 = vmatprep.mubr.bf16.mxu0 %v737
        %990 = vmatmul.mubr.bf16.gmra.mrb[0].mxu0 %v554
        %v991 = vpop.f32.mrb[0].mxu0
        %v992 = vadd.f32 %v310, %v991
        %v993 = vpop.f32.mrb[0].mxu0
        %v994 = vpop.f32.mrb[0].mxu0
        %v995 = vadd.f32 %v310, %v994
        %v996 = vpop.f32.mrb[0].mxu0
        %997 = vmatprep.mubr.bf16.mxu0 %v740
        %998 = vmatmul.mubr.bf16.gmra.mrb[0].mxu0 %v556
        %v999 = vpop.f32.mrb[0].mxu0
        %v1000 = vadd.f32 %v310, %v999
        %v1001 = vpop.f32.mrb[0].mxu0
        %v1002 = vpop.f32.mrb[0].mxu0
        %v1003 = vadd.f32 %v310, %v1002
        %v1004 = vpop.f32.mrb[0].mxu0
        %1005 = vmatprep.mubr.bf16.mxu0 %v743
        %1006 = vmatmul.mubr.bf16.gmra.mrb[0].mxu0 %v558
        %v1007 = vpop.f32.mrb[0].mxu0
        %v1008 = vadd.f32 %v310, %v1007
        %v1009 = vpop.f32.mrb[0].mxu0
        %v1010 = vpop.f32.mrb[0].mxu0
        %v1011 = vadd.f32 %v310, %v1010
        %v1012 = vpop.f32.mrb[0].mxu0
        %1013 = vmatprep.mubr.bf16.mxu0 %v746
        %1014 = vmatmul.mubr.bf16.gmra.mrb[0].mxu0 %v560
        %v1015 = vpop.f32.mrb[0].mxu0
        %v1016 = vadd.f32 %v310, %v1015
        %v1017 = vpop.f32.mrb[0].mxu0
        %v1018 = vpop.f32.mrb[0].mxu0
        %v1019 = vadd.f32 %v310, %v1018
        %v1020 = vpop.f32.mrb[0].mxu0
        %1021 = vmatprep.mubr.bf16.mxu0 %v749
        %1022 = vmatmul.mubr.bf16.gmra.mrb[0].mxu0 %v562
        %v1023 = vpop.f32.mrb[0].mxu0
        %v1024 = vadd.f32 %v310, %v1023
        %v1025 = vpop.f32.mrb[0].mxu0
        %v1026 = vpop.f32.mrb[0].mxu0
        %v1027 = vadd.f32 %v310, %v1026
        %v1028 = vpop.f32.mrb[0].mxu0
        %1029 = vmatprep.mubr.bf16.mxu0 %v752
        %1030 = vmatmul.mubr.bf16.gmra.mrb[0].mxu0 %v564
        %v1031 = vpop.f32.mrb[0].mxu0
        %v1032 = vadd.f32 %v310, %v1031
        %v1033 = vpop.f32.mrb[0].mxu0
        %v1034 = vpop.f32.mrb[0].mxu0
        %v1035 = vadd.f32 %v310, %v1034
        %v1036 = vpop.f32.mrb[0].mxu0
        %1037 = vmatprep.mubr.bf16.mxu0 %v755
        %1038 = vmatmul.mubr.bf16.gmra.mrb[0].mxu0 %v566
        %v1039 = vpop.f32.mrb[0].mxu0
        %v1040 = vadd.f32 %v310, %v1039
        %v1041 = vpop.f32.mrb[0].mxu0
        %v1042 = vpop.f32.mrb[0].mxu0
        %v1043 = vadd.f32 %v310, %v1042
        %v1044 = vpop.f32.mrb[0].mxu0
        %1045 = vdwg.mxu0
        %v1046 = vmax.f32 %v792, 0.0
        %v1047 = vmax.f32 %v795, 0.0
        %v1048 = vmax.f32 %v800, 0.0
        %v1049 = vmax.f32 %v803, 0.0
        %v1050 = vmax.f32 %v808, 0.0
        %v1051 = vmax.f32 %v811, 0.0
        %v1052 = vmax.f32 %v816, 0.0
        %v1053 = vmax.f32 %v819, 0.0
        %v1054 = vmax.f32 %v824, 0.0
        %v1055 = vmax.f32 %v827, 0.0
        %v1056 = vmax.f32 %v832, 0.0
        %v1057 = vmax.f32 %v835, 0.0
        %v1058 = vmax.f32 %v840, 0.0
        %v1059 = vmax.f32 %v843, 0.0
        %v1060 = vmax.f32 %v848, 0.0
        %v1061 = vmax.f32 %v851, 0.0
        %v1062 = vmax.f32 %v856, 0.0
        %v1063 = vmax.f32 %v859, 0.0
        %v1064 = vmax.f32 %v864, 0.0
        %v1065 = vmax.f32 %v867, 0.0
        %v1066 = vmax.f32 %v872, 0.0
        %v1067 = vmax.f32 %v875, 0.0
        %v1068 = vmax.f32 %v880, 0.0
        %v1069 = vmax.f32 %v883, 0.0
        %v1070 = vmax.f32 %v888, 0.0
        %v1071 = vmax.f32 %v891, 0.0
        %v1072 = vmax.f32 %v896, 0.0
        %v1073 = vmax.f32 %v899, 0.0
        %v1074 = vmax.f32 %v904, 0.0
        %v1075 = vmax.f32 %v907, 0.0
        %v1076 = vmax.f32 %v912, 0.0
        %v1077 = vmax.f32 %v915, 0.0
        %v1078 = vmax.f32 %v920, 0.0
        %v1079 = vmax.f32 %v923, 0.0
        %v1080 = vmax.f32 %v928, 0.0
        %v1081 = vmax.f32 %v931, 0.0
        %v1082 = vmax.f32 %v936, 0.0
        %v1083 = vmax.f32 %v939, 0.0
        %v1084 = vmax.f32 %v944, 0.0
        %v1085 = vmax.f32 %v947, 0.0
        %v1086 = vmax.f32 %v952, 0.0
        %v1087 = vmax.f32 %v955, 0.0
        %v1088 = vmax.f32 %v960, 0.0
        %v1089 = vmax.f32 %v963, 0.0
        %v1090 = vmax.f32 %v968, 0.0
        %v1091 = vmax.f32 %v971, 0.0
        %v1092 = vmax.f32 %v976, 0.0
        %v1093 = vmax.f32 %v979, 0.0
        %v1094 = vmax.f32 %v984, 0.0
        %v1095 = vmax.f32 %v987, 0.0
        %v1096 = vmax.f32 %v992, 0.0
        %v1097 = vmax.f32 %v995, 0.0
        %v1098 = vmax.f32 %v1000, 0.0
        %v1099 = vmax.f32 %v1003, 0.0
        %v1100 = vmax.f32 %v1008, 0.0
        %v1101 = vmax.f32 %v1011, 0.0
        %v1102 = vmax.f32 %v1016, 0.0
        %v1103 = vmax.f32 %v1019, 0.0
        %v1104 = vmax.f32 %v1024, 0.0
        %v1105 = vmax.f32 %v1027, 0.0
        %v1106 = vmax.f32 %v1032, 0.0
        %v1107 = vmax.f32 %v1035, 0.0
        %v1108 = vmax.f32 %v1040, 0.0
        %v1109 = vmax.f32 %v1043, 0.0
        %v1110 = vpack.c.bf16 %v1047, %v1046
        %v1111 = vpack.c.bf16 %v1049, %v1048
        %v1112 = vpack.c.bf16 %v1051, %v1050
        %v1113 = vpack.c.bf16 %v1053, %v1052
        %v1114 = vpack.c.bf16 %v1055, %v1054
        %v1115 = vpack.c.bf16 %v1057, %v1056
        %v1116 = vpack.c.bf16 %v1059, %v1058
        %v1117 = vpack.c.bf16 %v1061, %v1060
        %v1118 = vpack.c.bf16 %v1063, %v1062
        %v1119 = vpack.c.bf16 %v1065, %v1064
        %v1120 = vpack.c.bf16 %v1067, %v1066
        %v1121 = vpack.c.bf16 %v1069, %v1068
        %v1122 = vpack.c.bf16 %v1071, %v1070
        %v1123 = vpack.c.bf16 %v1073, %v1072
        %v1124 = vpack.c.bf16 %v1075, %v1074
        %v1125 = vpack.c.bf16 %v1077, %v1076
        %v1126 = vpack.c.bf16 %v1079, %v1078
        %v1127 = vpack.c.bf16 %v1081, %v1080
        %v1128 = vpack.c.bf16 %v1083, %v1082
        %v1129 = vpack.c.bf16 %v1085, %v1084
        %v1130 = vpack.c.bf16 %v1087, %v1086
        %v1131 = vpack.c.bf16 %v1089, %v1088
        %v1132 = vpack.c.bf16 %v1091, %v1090
        %v1133 = vpack.c.bf16 %v1093, %v1092
        %v1134 = vpack.c.bf16 %v1095, %v1094
        %v1135 = vpack.c.bf16 %v1097, %v1096
        %v1136 = vpack.c.bf16 %v1099, %v1098
        %v1137 = vpack.c.bf16 %v1101, %v1100
        %v1138 = vpack.c.bf16 %v1103, %v1102
        %v1139 = vpack.c.bf16 %v1105, %v1104
        %v1140 = vpack.c.bf16 %v1107, %v1106
        %v1141 = vpack.c.bf16 %v1109, %v1108
        %v1174 = vunpack.c.l.b16 %v1110
        %v1175 = vunpack.c.h.b16 %v1110
        %v1176 = vunpack.c.l.b16 %v1111
        %v1177 = vunpack.c.h.b16 %v1111
        %v1178 = vunpack.c.l.b16 %v1112
        %v1179 = vunpack.c.h.b16 %v1112
        %v1180 = vunpack.c.l.b16 %v1113
        %v1181 = vunpack.c.h.b16 %v1113
        %v1182 = vunpack.c.l.b16 %v1114
        %v1183 = vunpack.c.h.b16 %v1114
        %v1184 = vunpack.c.l.b16 %v1115
        %v1185 = vunpack.c.h.b16 %v1115
        %v1186 = vunpack.c.l.b16 %v1116
        %v1187 = vunpack.c.h.b16 %v1116
        %v1188 = vunpack.c.l.b16 %v1117
        %v1189 = vunpack.c.h.b16 %v1117
        %v1190 = vunpack.c.l.b16 %v1118
        %v1191 = vunpack.c.h.b16 %v1118
        %v1192 = vunpack.c.l.b16 %v1119
        %v1193 = vunpack.c.h.b16 %v1119
        %v1194 = vunpack.c.l.b16 %v1120
        %v1195 = vunpack.c.h.b16 %v1120
        %v1196 = vunpack.c.l.b16 %v1121
        %v1197 = vunpack.c.h.b16 %v1121
        %v1198 = vunpack.c.l.b16 %v1122
        %v1199 = vunpack.c.h.b16 %v1122
        %v1200 = vunpack.c.l.b16 %v1123
        %v1201 = vunpack.c.h.b16 %v1123
        %v1202 = vunpack.c.l.b16 %v1124
        %v1203 = vunpack.c.h.b16 %v1124
        %v1204 = vunpack.c.l.b16 %v1125
        %v1205 = vunpack.c.h.b16 %v1125
        %v1206 = vunpack.c.l.b16 %v1126
        %v1207 = vunpack.c.h.b16 %v1126
        %v1208 = vunpack.c.l.b16 %v1127
        %v1209 = vunpack.c.h.b16 %v1127
        %v1210 = vunpack.c.l.b16 %v1128
        %v1211 = vunpack.c.h.b16 %v1128
        %v1212 = vunpack.c.l.b16 %v1129
        %v1213 = vunpack.c.h.b16 %v1129
        %v1214 = vunpack.c.l.b16 %v1130
        %v1215 = vunpack.c.h.b16 %v1130
        %v1216 = vunpack.c.l.b16 %v1131
        %v1217 = vunpack.c.h.b16 %v1131
        %v1218 = vunpack.c.l.b16 %v1132
        %v1219 = vunpack.c.h.b16 %v1132
        %v1220 = vunpack.c.l.b16 %v1133
        %v1221 = vunpack.c.h.b16 %v1133
        %v1222 = vunpack.c.l.b16 %v1134
        %v1223 = vunpack.c.h.b16 %v1134
        %v1224 = vunpack.c.l.b16 %v1135
        %v1225 = vunpack.c.h.b16 %v1135
        %v1226 = vunpack.c.l.b16 %v1136
        %v1227 = vunpack.c.h.b16 %v1136
        %v1228 = vunpack.c.l.b16 %v1137
        %v1229 = vunpack.c.h.b16 %v1137
        %v1230 = vunpack.c.l.b16 %v1138
        %v1231 = vunpack.c.h.b16 %v1138
        %v1232 = vunpack.c.l.b16 %v1139
        %v1233 = vunpack.c.h.b16 %v1139
        %v1234 = vunpack.c.l.b16 %v1140
        %v1235 = vunpack.c.h.b16 %v1140
        %v1236 = vunpack.c.l.b16 %v1141
        %v1237 = vunpack.c.h.b16 %v1141
        %v1238 = vpack.c.b16 %v1174, %v1174
        %v1239 = vpack.c.b16 %v1175, %v1175
        %v1240 = vpack.c.b16 %v1176, %v1176
        %v1241 = vpack.c.b16 %v1177, %v1177
        %v1242 = vpack.c.b16 %v1178, %v1178
        %v1243 = vpack.c.b16 %v1179, %v1179
        %v1244 = vpack.c.b16 %v1180, %v1180
        %v1245 = vpack.c.b16 %v1181, %v1181
        %v1246 = vpack.c.b16 %v1182, %v1182
        %v1247 = vpack.c.b16 %v1183, %v1183
        %v1248 = vpack.c.b16 %v1184, %v1184
        %v1249 = vpack.c.b16 %v1185, %v1185
        %v1250 = vpack.c.b16 %v1186, %v1186
        %v1251 = vpack.c.b16 %v1187, %v1187
        %v1252 = vpack.c.b16 %v1188, %v1188
        %v1253 = vpack.c.b16 %v1189, %v1189
        %v1254 = vpack.c.b16 %v1190, %v1190
        %v1255 = vpack.c.b16 %v1191, %v1191
        %v1256 = vpack.c.b16 %v1192, %v1192
        %v1257 = vpack.c.b16 %v1193, %v1193
        %v1258 = vpack.c.b16 %v1194, %v1194
        %v1259 = vpack.c.b16 %v1195, %v1195
        %v1260 = vpack.c.b16 %v1196, %v1196
        %v1261 = vpack.c.b16 %v1197, %v1197
        %v1262 = vpack.c.b16 %v1198, %v1198
        %v1263 = vpack.c.b16 %v1199, %v1199
        %v1264 = vpack.c.b16 %v1200, %v1200
        %v1265 = vpack.c.b16 %v1201, %v1201
        %v1266 = vpack.c.b16 %v1202, %v1202
        %v1267 = vpack.c.b16 %v1203, %v1203
        %v1268 = vpack.c.b16 %v1204, %v1204
        %v1269 = vpack.c.b16 %v1205, %v1205
        %v1270 = vpack.c.b16 %v1206, %v1206
        %v1271 = vpack.c.b16 %v1207, %v1207
        %v1272 = vpack.c.b16 %v1208, %v1208
        %v1273 = vpack.c.b16 %v1209, %v1209
        %v1274 = vpack.c.b16 %v1210, %v1210
        %v1275 = vpack.c.b16 %v1211, %v1211
        %v1276 = vpack.c.b16 %v1212, %v1212
        %v1277 = vpack.c.b16 %v1213, %v1213
        %v1278 = vpack.c.b16 %v1214, %v1214
        %v1279 = vpack.c.b16 %v1215, %v1215
        %v1280 = vpack.c.b16 %v1216, %v1216
        %v1281 = vpack.c.b16 %v1217, %v1217
        %v1282 = vpack.c.b16 %v1218, %v1218
        %v1283 = vpack.c.b16 %v1219, %v1219
        %v1284 = vpack.c.b16 %v1220, %v1220
        %v1285 = vpack.c.b16 %v1221, %v1221
        %v1286 = vpack.c.b16 %v1222, %v1222
        %v1287 = vpack.c.b16 %v1223, %v1223
        %v1288 = vpack.c.b16 %v1224, %v1224
        %v1289 = vpack.c.b16 %v1225, %v1225
        %v1290 = vpack.c.b16 %v1226, %v1226
        %v1291 = vpack.c.b16 %v1227, %v1227
        %v1292 = vpack.c.b16 %v1228, %v1228
        %v1293 = vpack.c.b16 %v1229, %v1229
        %v1294 = vpack.c.b16 %v1230, %v1230
        %v1295 = vpack.c.b16 %v1231, %v1231
        %v1296 = vpack.c.b16 %v1232, %v1232
        %v1297 = vpack.c.b16 %v1233, %v1233
        %v1298 = vpack.c.b16 %v1234, %v1234
        %v1299 = vpack.c.b16 %v1235, %v1235
        %v1300 = vpack.c.b16 %v1236, %v1236
        %v1301 = vpack.c.b16 %v1237, %v1237
        %vm1366 = vcmask 519168
        %1367 = vst.msk [vmem:[%s204] sm:$0xf] %vm1366, %v1238
        %1368 = vst.msk [vmem:[%s204 + $0x4] sm:$0xf] %vm1366, %v1239
        %1369 = vst.msk [vmem:[%s204 + $0x8] sm:$0xf] %vm1366, %v1240
        %1370 = vst.msk [vmem:[%s204 + $0xc] sm:$0xf] %vm1366, %v1241
        %1371 = vst.msk [vmem:[%s204 + $0x10] sm:$0xf] %vm1366, %v1242
        %1372 = vst.msk [vmem:[%s204 + $0x14] sm:$0xf] %vm1366, %v1243
        %1373 = vst.msk [vmem:[%s204 + $0x18] sm:$0xf] %vm1366, %v1244
        %1374 = vst.msk [vmem:[%s204 + $0x1c] sm:$0xf] %vm1366, %v1245
        %1375 = vst.msk [vmem:[%s204 + $0x20] sm:$0xf] %vm1366, %v1246
        %1376 = vst.msk [vmem:[%s204 + $0x24] sm:$0xf] %vm1366, %v1247
        %1377 = vst.msk [vmem:[%s204 + $0x28] sm:$0xf] %vm1366, %v1248
        %1378 = vst.msk [vmem:[%s204 + $0x2c] sm:$0xf] %vm1366, %v1249
        %1379 = vst.msk [vmem:[%s204 + $0x30] sm:$0xf] %vm1366, %v1250
        %1380 = vst.msk [vmem:[%s204 + $0x34] sm:$0xf] %vm1366, %v1251
        %1381 = vst.msk [vmem:[%s204 + $0x38] sm:$0xf] %vm1366, %v1252
        %1382 = vst.msk [vmem:[%s204 + $0x3c] sm:$0xf] %vm1366, %v1253
        %1383 = vst.msk [vmem:[%s204 + $0x40] sm:$0xf] %vm1366, %v1254
        %1384 = vst.msk [vmem:[%s204 + $0x44] sm:$0xf] %vm1366, %v1255
        %1385 = vst.msk [vmem:[%s204 + $0x48] sm:$0xf] %vm1366, %v1256
        %1386 = vst.msk [vmem:[%s204 + $0x4c] sm:$0xf] %vm1366, %v1257
        %1387 = vst.msk [vmem:[%s204 + $0x50] sm:$0xf] %vm1366, %v1258
        %1388 = vst.msk [vmem:[%s204 + $0x54] sm:$0xf] %vm1366, %v1259
        %1389 = vst.msk [vmem:[%s204 + $0x58] sm:$0xf] %vm1366, %v1260
        %1390 = vst.msk [vmem:[%s204 + $0x5c] sm:$0xf] %vm1366, %v1261
        %1391 = vst.msk [vmem:[%s204 + $0x60] sm:$0xf] %vm1366, %v1262
        %1392 = vst.msk [vmem:[%s204 + $0x64] sm:$0xf] %vm1366, %v1263
        %1393 = vst.msk [vmem:[%s204 + $0x68] sm:$0xf] %vm1366, %v1264
        %1394 = vst.msk [vmem:[%s204 + $0x6c] sm:$0xf] %vm1366, %v1265
        %1395 = vst.msk [vmem:[%s204 + $0x70] sm:$0xf] %vm1366, %v1266
        %1396 = vst.msk [vmem:[%s204 + $0x74] sm:$0xf] %vm1366, %v1267
        %1397 = vst.msk [vmem:[%s204 + $0x78] sm:$0xf] %vm1366, %v1268
        %1398 = vst.msk [vmem:[%s204 + $0x7c] sm:$0xf] %vm1366, %v1269
        %1399 = vst.msk [vmem:[%s204 + $0x80] sm:$0xf] %vm1366, %v1270
        %1400 = vst.msk [vmem:[%s204 + $0x84] sm:$0xf] %vm1366, %v1271
        %1401 = vst.msk [vmem:[%s204 + $0x88] sm:$0xf] %vm1366, %v1272
        %1402 = vst.msk [vmem:[%s204 + $0x8c] sm:$0xf] %vm1366, %v1273
        %1403 = vst.msk [vmem:[%s204 + $0x90] sm:$0xf] %vm1366, %v1274
        %1404 = vst.msk [vmem:[%s204 + $0x94] sm:$0xf] %vm1366, %v1275
        %1405 = vst.msk [vmem:[%s204 + $0x98] sm:$0xf] %vm1366, %v1276
        %1406 = vst.msk [vmem:[%s204 + $0x9c] sm:$0xf] %vm1366, %v1277
        %1407 = vst.msk [vmem:[%s204 + $0xa0] sm:$0xf] %vm1366, %v1278
        %1408 = vst.msk [vmem:[%s204 + $0xa4] sm:$0xf] %vm1366, %v1279
        %1409 = vst.msk [vmem:[%s204 + $0xa8] sm:$0xf] %vm1366, %v1280
        %1410 = vst.msk [vmem:[%s204 + $0xac] sm:$0xf] %vm1366, %v1281
        %1411 = vst.msk [vmem:[%s204 + $0xb0] sm:$0xf] %vm1366, %v1282
        %1412 = vst.msk [vmem:[%s204 + $0xb4] sm:$0xf] %vm1366, %v1283
        %1413 = vst.msk [vmem:[%s204 + $0xb8] sm:$0xf] %vm1366, %v1284
        %1414 = vst.msk [vmem:[%s204 + $0xbc] sm:$0xf] %vm1366, %v1285
        %1415 = vst.msk [vmem:[%s204 + $0xc0] sm:$0xf] %vm1366, %v1286
        %1416 = vst.msk [vmem:[%s204 + $0xc4] sm:$0xf] %vm1366, %v1287
        %1417 = vst.msk [vmem:[%s204 + $0xc8] sm:$0xf] %vm1366, %v1288
        %1418 = vst.msk [vmem:[%s204 + $0xcc] sm:$0xf] %vm1366, %v1289
        %1419 = vst.msk [vmem:[%s204 + $0xd0] sm:$0xf] %vm1366, %v1290
        %1420 = vst.msk [vmem:[%s204 + $0xd4] sm:$0xf] %vm1366, %v1291
        %1421 = vst.msk [vmem:[%s204 + $0xd8] sm:$0xf] %vm1366, %v1292
        %1422 = vst.msk [vmem:[%s204 + $0xdc] sm:$0xf] %vm1366, %v1293
        %1423 = vst.msk [vmem:[%s204 + $0xe0] sm:$0xf] %vm1366, %v1294
        %1424 = vst.msk [vmem:[%s204 + $0xe4] sm:$0xf] %vm1366, %v1295
        %1425 = vst.msk [vmem:[%s204 + $0xe8] sm:$0xf] %vm1366, %v1296
        %1426 = vst.msk [vmem:[%s204 + $0xec] sm:$0xf] %vm1366, %v1297
        %1427 = vst.msk [vmem:[%s204 + $0xf0] sm:$0xf] %vm1366, %v1298
        %1428 = vst.msk [vmem:[%s204 + $0xf4] sm:$0xf] %vm1366, %v1299
        %1429 = vst.msk [vmem:[%s204 + $0xf8] sm:$0xf] %vm1366, %v1300
        %1430 = vst.msk [vmem:[%s204 + $0xfc] sm:$0xf] %vm1366, %v1301
        %s1431 = sand.u32 %s117, 1
        %s1432 = scalar_lea.sflag [#allocation3], %s1431
        %s1433 = sand.u32 %s117, 1
        %s1434 = smul.addr %s1433, 256
        %s1435 = scalar_lea.vmem [#allocation2], %s1434
        // Predicated region
        $region33: #{fn.1} parent=31 // pred_check
          %p1436 = pneg %p127
        $region34: #{fn.1} parent=31 // pred_check_branch
          %1438 = sbr.rel (%p1436) target = $region36
        $region35: #{fn.1} parent=31 // pred_region
          %s1439 = smul.u32 64, %s21
          %s1441 = ssub.s32 4096, 4096
          %1442 = vsyncadd %s1432, %s1441
          %s1443 = sadd.s32 %s22, %s1439
          %s1444 = smul.addr %s1443, 64
          %s1445 = scalar_lea.hbm %s3, %s1444
          %s1446 = sshll.u32 %s1435, 4
          %s1447 = int_to_ptr.vmem [resolvable:$true] %s1446
          %1452 = dma.vmem_to_hbm [thread:$0]  %s1447, 4096, %s1445, %s1432, 64, 64, 4
        $region36: #{fn.1} parent=31 // pred_fallthru
          _
      $region32: #{fn.1} parent=5 // pred_fallthru
        _
      %p1453 = scmp.le.s32.totalorder 2, %s12
      // Predicated region
      $region37: #{fn.1} parent=5 // pred_check
        %p1454 = pneg %p1453
      $region38: #{fn.1} parent=5 // pred_check_branch
        %1456 = sbr.rel (%p1454) target = $region40
      $region39: #{fn.1} parent=5 // pred_region
        %s1457 = ssub.s32 %s12, 2
        // Predicated region
        $region41: #{fn.1} parent=39 // pred_check
          %p1458 = pneg %p133
        $region42: #{fn.1} parent=39 // pred_check_branch
          %1460 = sbr.rel (%p1458) target = $region44
        $region43: #{fn.1} parent=39 // pred_region
          %s1461 = sand.u32 %s118, 1
          %s1462 = scalar_lea.sflag [#allocation3], %s1461
          %s1463 = sand.u32 %s118, 1
          %s1464 = smul.addr %s1463, 256
          %s1465 = scalar_lea.vmem [#allocation2], %s1464
          %1466 = dma.done %s1462, 4096
        $region44: #{fn.1} parent=39 // pred_fallthru
          _
      $region40: #{fn.1} parent=5 // pred_fallthru
        _
    $region6: #{fn.1} parent=1 // loop_footer
      %s16 = sadd.s32 1, %s12
    $region7: #{fn.1} parent=1 // loop_footer_branch
      %11 = sbr.rel target = $region3
    $region8: #{fn.1} parent=1 // loop_exit
      _
    %1467 = vsyncpa [#allocation3], 1
    %s1468 = scalar_lea.sflag [#allocation3], 1
    %1469 = vsyncpa %s1468, 1

</llo_original>
